<compile_context>
chip_gen: v7x
topology: tpu7x:2x2x1
jax: 0.10.0
libtpu: 0.0.40
codegen_flags: <defaults>
</compile_context>

<pallas_src>
import jax
import jax.numpy as jnp
import numpy as np
from jax.experimental import pallas as pl
from jax.experimental.pallas import tpu as pltpu


_VMEM_BUDGET_BYTES = 48 << 20  # conservative: fits v7x 64 MiB/TC with headroom


# ----------------------------------------------------------------------------
# Pallas kernel: one batch tile -> one (8, 128) lane-dense tile holding the
# partial sum of (||grad||_2 - 1)^2 over that tile (value broadcast over tile).
# ----------------------------------------------------------------------------
def _wgan_gp_partial_kernel(
    real_ref,    # (TB, D) f32
    fake_ref,    # (TB, D) f32
    alpha_ref,   # (TB, 1) f32   uniform(0,1) mixing coefficients
    w1_ref,      # (D, H)  f32   layer-1 weight            (resident, 1 buffer)
    b1_ref,      # (1, H)  f32   layer-1 bias              (resident, 1 buffer)
    w1s_t_ref,   # (H, D)  f32   (W1 * w2)^T, precomputed  (resident, 1 buffer)
    out_ref,     # (1, 8, 128) f32   per-tile GP partial sum (lane-dense)
):
    # interpolation: x = fake + alpha * (real - fake)   (2 full-tile VPU passes)
    real = real_ref[...]
    fake = fake_ref[...]
    x = fake + alpha_ref[...] * (real - fake)                          # (TB, D)

    # hidden pre-activation (MXU)
    y = jnp.dot(x, w1_ref[...], preferred_element_type=jnp.float32) + b1_ref[...]

    # analytic grad of sum(D(x)) w.r.t. x:
    #   grads = relu'(y) @ (W1 * w2)^T
    # relu' at exactly y==0 taken as 0 (measure-zero difference vs autodiff).
    mask = (y > 0.0).astype(jnp.float32)                               # (TB, H)
    grads = jnp.dot(mask, w1s_t_ref[...],
                    preferred_element_type=jnp.float32)                # (TB, D)

    sq_norm = jnp.sum(grads * grads, axis=1, keepdims=True)            # (TB, 1)
    gp_sum = jnp.sum((jnp.sqrt(sq_norm) - 1.0) ** 2)

    # broadcast the scalar into a full lane/sublane-dense tile -> unmasked vst;
    # the wrapper reads element [0, 0] of each tile.
    out_ref[...] = jnp.full(out_ref.shape, gp_sum, dtype=out_ref.dtype)


# ----------------------------------------------------------------------------
# Wrapper
# ----------------------------------------------------------------------------
def wgan_gp_discriminator_loss(pred_real, pred_fake, real, fake, alpha,
                               w1, b1, w2, lambda_gradient_penalty=2.0,
                               block_b=None):
    """Wasserstein GAN-GP discriminator loss, gridded over the batch."""
    B, D = real.shape
    H = w1.shape[1]

    # resident weight footprint (single-buffered): W1, (W1*w2)^T, b1 (padded)
    resident_bytes = (2 * D * H + 8 * H) * 4
    # per batch-row streaming footprint: real + fake double-buffered, alpha
    # (lane-padded to 128) double-buffered
    per_row_bytes = (2 * 2 * D + 2 * 128) * 4

    if block_b is None:
        fit = max(8, (_VMEM_BUDGET_BYTES - resident_bytes) // per_row_bytes)
        block_b = int(min(1024, B, fit))
        block_b = max(8, (block_b // 8) * 8)      # keep sublane-aligned
        while block_b > 8 and B % block_b != 0:
            block_b -= 8
        if B % block_b != 0:
            block_b = B                            # small/odd batch: one tile
    assert B % block_b == 0, "batch size must be divisible by the batch tile"
    # TODO(synk): pad / masked tail tile for arbitrary batch sizes.
    num_tiles = B // block_b

    # wrapper-side layout plumbing (free): pre-scale W1 by w2 and transpose so
    # the kernel's gradient matmul needs no XLU transpose and no w2 select.
    w1s_t = jnp.transpose(w1 * jnp.reshape(w2, (1, H)))   # (H, D)

    streamed_bytes = (2 * 2 * block_b * D + 2 * block_b * 128 + 2 * 8 * 128) * 4
    vmem_limit_bytes = int(min(max(2 * (streamed_bytes + resident_bytes),
                                   16 << 20),
                               _VMEM_BUDGET_BYTES))

    grid_spec = pltpu.PrefetchScalarGridSpec(
        num_scalar_prefetch=0,
        grid=(num_tiles,),
        in_specs=[
            pl.BlockSpec((block_b, D), lambda i: (i, 0)),   # real
            pl.BlockSpec((block_b, D), lambda i: (i, 0)),   # fake
            pl.BlockSpec((block_b, 1), lambda i: (i, 0)),   # alpha
            # resident weights: block never changes -> single buffer
            pl.BlockSpec((D, H), lambda i: (0, 0), pipeline_mode=pl.Buffered(1)),
            pl.BlockSpec((1, H), lambda i: (0, 0), pipeline_mode=pl.Buffered(1)),
            pl.BlockSpec((H, D), lambda i: (0, 0), pipeline_mode=pl.Buffered(1)),
        ],
        out_specs=pl.BlockSpec((1, 8, 128), lambda i: (i, 0, 0)),
    )

    partials = pl.pallas_call(
        _wgan_gp_partial_kernel,
        out_shape=jax.ShapeDtypeStruct((num_tiles, 8, 128), jnp.float32),
        grid_spec=grid_spec,
        compiler_params=pltpu.CompilerParams(
            dimension_semantics=("parallel",),
            vmem_limit_bytes=vmem_limit_bytes,
        ),
    )(real, fake, alpha, w1, b1, w1s_t)

    # tiny cross-tile reduction + scalar combine in XLA (pred means moved here
    # per review: they are trivially cheap and free two kernel inputs/DMAs).
    gp_mean = jnp.sum(partials[:, 0, 0]) / jnp.float32(B)
    return (-jnp.mean(pred_real) + jnp.mean(pred_fake)
            + lambda_gradient_penalty * gp_mean)


# ----------------------------------------------------------------------------
# Pure-JAX reference (uses autodiff, mirrors the PyTorch semantics)
# ----------------------------------------------------------------------------
def _disc_fwd(x, w1, b1, w2, b2):
    return jnp.maximum(x @ w1 + b1, 0.0) @ w2 + b2


def _reference_loss(pred_real, pred_fake, real, fake, alpha, w1, b1, w2, b2, lam):
    x = alpha * real + (1.0 - alpha) * fake
    grads = jax.grad(lambda xi: jnp.sum(_disc_fwd(xi, w1, b1, w2, b2)))(x)
    norms = jnp.linalg.norm(grads.reshape(grads.shape[0], -1), axis=1)
    gp = jnp.mean((norms - 1.0) ** 2)
    return -jnp.mean(pred_real) + jnp.mean(pred_fake) + lam * gp


# ----------------------------------------------------------------------------
if __name__ == "__main__":
    # small shapes; D multiple of 128 (lanes), H multiple of 256 (v6e/v7x MXU)
    B, D, H = 32, 128, 256
    TB = 8                     # small explicit tile -> exercises the grid (4 tiles)

    key = jax.random.PRNGKey(0)
    k_real, k_fake, k_alpha, k_w1, k_w2 = jax.random.split(key, 5)

    real_samples = jax.random.normal(k_real, (B, D), dtype=jnp.float32)
    fake_samples = jax.random.normal(k_fake, (B, D), dtype=jnp.float32)
    # alpha is generated inside the PyTorch module (torch.rand); passed in here
    # for determinism.
    alpha = jax.random.uniform(k_alpha, (B, 1), dtype=jnp.float32)

    # deterministic synthetic discriminator parameters
    w1 = jax.random.normal(k_w1, (D, H), dtype=jnp.float32) * (1.0 / jnp.sqrt(D))
    b1 = jnp.zeros((1, H), dtype=jnp.float32)
    w2 = jax.random.normal(k_w2, (H, 1), dtype=jnp.float32) * (1.0 / jnp.sqrt(H))
    b2 = jnp.zeros((1, 1), dtype=jnp.float32)

    # raw discriminator predictions (inputs to the loss, as in the PyTorch API)
    pred_real = _disc_fwd(real_samples, w1, b1, w2, b2)   # (B, 1)
    pred_fake = _disc_fwd(fake_samples, w1, b1, w2, b2)   # (B, 1)

    lam = 2.0

    loss = wgan_gp_discriminator_loss(pred_real, pred_fake, real_samples,
                                      fake_samples, alpha, w1, b1, w2,
                                      lambda_gradient_penalty=lam, block_b=TB)
    loss = jax.block_until_ready(loss)

    ref = _reference_loss(pred_real, pred_fake, real_samples, fake_samples,
                          alpha, w1, b1, w2, b2, lam)
    np.testing.assert_allclose(np.asarray(loss), np.asarray(ref),
                               rtol=1e-4, atol=1e-4)

    print("KERNEL_OK")
</pallas_src>

<mosaic_0001>
module attributes {stable_mosaic.version = 11 : i64} {
  func.func @_wgan_gp_partial_kernel(%arg0: i32, %arg1: memref<8x128xf32, #tpu.memory_space<vmem>>, %arg2: memref<8x128xf32, #tpu.memory_space<vmem>>, %arg3: memref<8x1xf32, #tpu.memory_space<vmem>>, %arg4: memref<128x256xf32, #tpu.memory_space<vmem>>, %arg5: memref<1x256xf32, #tpu.memory_space<vmem>>, %arg6: memref<256x128xf32, #tpu.memory_space<vmem>>, %arg7: memref<1x8x128xf32, #tpu.memory_space<vmem>>) attributes {dimension_semantics = [#tpu.dimension_semantics<parallel>], iteration_bounds = array<i64: 4>, scalar_prefetch = 0 : i64, scratch_operands = 0 : i64, tpu.core_type = #tpu.core_type<tc>, window_params = [{transform_indices = @transform_0, window_bounds = array<i64: 8, 128>}, {transform_indices = @transform_1, window_bounds = array<i64: 8, 128>}, {transform_indices = @transform_2, window_bounds = array<i64: 8, 1>}, {pipeline_mode = #tpu.pipeline_mode<synchronous>, transform_indices = @transform_3, window_bounds = array<i64: 128, 256>}, {pipeline_mode = #tpu.pipeline_mode<synchronous>, transform_indices = @transform_4, window_bounds = array<i64: 1, 256>}, {pipeline_mode = #tpu.pipeline_mode<synchronous>, transform_indices = @transform_5, window_bounds = array<i64: 256, 128>}, {transform_indices = @transform_6, window_bounds = array<i64: 1, 8, 128>}]} {
    %c0 = arith.constant 0 : index
    %c0_0 = arith.constant 0 : index
    %0 = vector.load %arg1[%c0, %c0_0] : memref<8x128xf32, #tpu.memory_space<vmem>>, vector<8x128xf32>
    %c0_1 = arith.constant 0 : index
    %c0_2 = arith.constant 0 : index
    %1 = vector.load %arg2[%c0_1, %c0_2] : memref<8x128xf32, #tpu.memory_space<vmem>>, vector<8x128xf32>
    %c0_3 = arith.constant 0 : index
    %c0_4 = arith.constant 0 : index
    %2 = vector.load %arg3[%c0_3, %c0_4] : memref<8x1xf32, #tpu.memory_space<vmem>>, vector<8x1xf32>
    %3 = arith.subf %0, %1 : vector<8x128xf32>
    %4 = vector.broadcast %2 : vector<8x1xf32> to vector<8x128xf32>
    %5 = arith.mulf %4, %3 : vector<8x128xf32>
    %6 = arith.addf %1, %5 : vector<8x128xf32>
    %c0_5 = arith.constant 0 : index
    %c0_6 = arith.constant 0 : index
    %7 = vector.load %arg4[%c0_5, %c0_6] : memref<128x256xf32, #tpu.memory_space<vmem>>, vector<128x256xf32>
    %cst = arith.constant dense<0.000000e+00> : vector<8x256xf32>
    %8 = tpu.matmul %6, %7, %cst {dimension_numbers = #tpu.dot_dimension_numbers<[1], [0], [0], [1], [0, 0, 1, 1], [], []>} : vector<8x128xf32>, vector<128x256xf32>, vector<8x256xf32> -> vector<8x256xf32>
    %c0_7 = arith.constant 0 : index
    %c0_8 = arith.constant 0 : index
    %9 = vector.load %arg5[%c0_7, %c0_8] : memref<1x256xf32, #tpu.memory_space<vmem>>, vector<1x256xf32>
    %10 = vector.broadcast %9 : vector<1x256xf32> to vector<8x256xf32>
    %11 = arith.addf %8, %10 : vector<8x256xf32>
    %cst_9 = arith.constant 0.000000e+00 : f32
    %12 = vector.broadcast %cst_9 : f32 to vector<8x256xf32>
    %13 = arith.cmpf ogt, %11, %12 : vector<8x256xf32>
    %14 = arith.extui %13 : vector<8x256xi1> to vector<8x256xi32>
    %15 = arith.sitofp %14 : vector<8x256xi32> to vector<8x256xf32>
    %c0_10 = arith.constant 0 : index
    %c0_11 = arith.constant 0 : index
    %16 = vector.load %arg6[%c0_10, %c0_11] : memref<256x128xf32, #tpu.memory_space<vmem>>, vector<256x128xf32>
    %cst_12 = arith.constant dense<0.000000e+00> : vector<8x128xf32>
    %17 = tpu.matmul %15, %16, %cst_12 {dimension_numbers = #tpu.dot_dimension_numbers<[1], [0], [0], [1], [0, 0, 1, 1], [], []>} : vector<8x256xf32>, vector<256x128xf32>, vector<8x128xf32> -> vector<8x128xf32>
    %18 = arith.mulf %17, %17 : vector<8x128xf32>
    %cst_13 = arith.constant dense<0.000000e+00> : vector<8xf32>
    %19 = vector.multi_reduction <add>, %18, %cst_13 [1] : vector<8x128xf32> to vector<8xf32>
    %20 = vector.shape_cast %19 : vector<8xf32> to vector<8x1xf32>
    %21 = math.sqrt %20 : vector<8x1xf32>
    %cst_14 = arith.constant 1.000000e+00 : f32
    %22 = vector.broadcast %cst_14 : f32 to vector<8x1xf32>
    %23 = arith.subf %21, %22 : vector<8x1xf32>
    %24 = arith.mulf %23, %23 : vector<8x1xf32>
    %25 = vector.shape_cast %24 : vector<8x1xf32> to vector<1x8x1xf32>
    %cst_15 = arith.constant dense<0.000000e+00> : vector<1xf32>
    %26 = vector.multi_reduction <add>, %25, %cst_15 [1, 2] : vector<1x8x1xf32> to vector<1xf32>
    %27 = vector.shape_cast %26 : vector<1xf32> to vector<1x1x1xf32>
    %28 = vector.extract %27[0, 0, 0] : f32 from vector<1x1x1xf32>
    %29 = vector.broadcast %28 : f32 to vector<1x8x128xf32>
    %c0_16 = arith.constant 0 : index
    %c0_17 = arith.constant 0 : index
    %c0_18 = arith.constant 0 : index
    %30 = vector.load %arg7[%c0_16, %c0_17, %c0_18] : memref<1x8x128xf32, #tpu.memory_space<vmem>>, vector<1x8x128xf32>
    tpu.vector_store %arg7[%c0_16, %c0_17, %c0_18], %29 {strides = array<i32>} : memref<1x8x128xf32, #tpu.memory_space<vmem>>, vector<1x8x128xf32>,
    return
  }
  func.func @transform_0(%arg0: i32) -> (i32, i32) {
    %c0_i32 = arith.constant 0 : i32
    %c0_i32_0 = arith.constant 0 : i32
    return %arg0, %c0_i32 : i32, i32
  }
  func.func @transform_1(%arg0: i32) -> (i32, i32) {
    %c0_i32 = arith.constant 0 : i32
    %c0_i32_0 = arith.constant 0 : i32
    return %arg0, %c0_i32 : i32, i32
  }
  func.func @transform_2(%arg0: i32) -> (i32, i32) {
    %c0_i32 = arith.constant 0 : i32
    %c0_i32_0 = arith.constant 0 : i32
    return %arg0, %c0_i32 : i32, i32
  }
  func.func @transform_3(%arg0: i32) -> (i32, i32) {
    %c0_i32 = arith.constant 0 : i32
    %c0_i32_0 = arith.constant 0 : i32
    %c0_i32_1 = arith.constant 0 : i32
    return %c0_i32, %c0_i32_0 : i32, i32
  }
  func.func @transform_4(%arg0: i32) -> (i32, i32) {
    %c0_i32 = arith.constant 0 : i32
    %c0_i32_0 = arith.constant 0 : i32
    %c0_i32_1 = arith.constant 0 : i32
    return %c0_i32, %c0_i32_0 : i32, i32
  }
  func.func @transform_5(%arg0: i32) -> (i32, i32) {
    %c0_i32 = arith.constant 0 : i32
    %c0_i32_0 = arith.constant 0 : i32
    %c0_i32_1 = arith.constant 0 : i32
    return %c0_i32, %c0_i32_0 : i32, i32
  }
  func.func @transform_6(%arg0: i32) -> (i32, i32, i32) {
    %c0_i32 = arith.constant 0 : i32
    %c0_i32_0 = arith.constant 0 : i32
    %c0_i32_1 = arith.constant 0 : i32
    return %arg0, %c0_i32, %c0_i32_0 : i32, i32, i32
  }
}

</mosaic_0001>

<llo_original>
// kernel: tpu_custom_call.1
$region0: #{tpu_custom_call.1}
  #allocation0 [shape = 'u32[]', space=smem, size = 0x4, offset = 0x4, fixed_abs, tag = 'smem constant byte address 0x4 - core index']
  #allocation1 [shape = 'u32[144,128]{1,0:T(1,128)}', space=vmem, size = 0x12000, scoped, tag = 'internal scratch']
  %s0 = inlined_call_operand.vmem [shape: f32[32,128], index: 0, kind: input, shape index: {}]
  %s1 = inlined_call_operand.hbm [shape: f32[32,128], index: 1, kind: input, shape index: {}]
  %s2 = inlined_call_operand.vmem [shape: f32[32,1], index: 2, kind: input, shape index: {}]
  %s3 = inlined_call_operand.hbm [shape: f32[128,256], index: 3, kind: input, shape index: {}]
  %s4 = inlined_call_operand.vmem [shape: f32[1,256], index: 4, kind: input, shape index: {}]
  %s5 = inlined_call_operand.hbm [shape: f32[256,128], index: 5, kind: input, shape index: {}]
  %s6 = inlined_call_operand.hbm [shape: f32[4,8,128], index: 6, kind: output, shape index: {}]
  %s7 = sld [smem:[#allocation0]]
  $region69: #{tpu_custom_call.1} parent=0
    _
  %s9 = ssub.s32 1, %s7
  %s10 = scalar_select 0, %s9, %s7
  $region1: #{tpu_custom_call.1} parent=0
    #allocation2 [shape = 'u8[8192]{0}', space=vmem, size = 0x2000, scoped, tag = 'input window, operand 1']
    #allocation3 [shape = 's32[2]{0}', space=sflag, size = 0x8, scoped, tag = 'scoped memory for tpu_custom_call.1']
    #allocation4 [shape = 's32[2]{0}', space=sflag, size = 0x8, scoped, tag = 'scoped memory for tpu_custom_call.1']
    #allocation5 [shape = 'u8[131072]{0}', space=vmem, size = 0x20000, scoped, tag = 'input window, operand 3, single buffered']
    #allocation6 [shape = 's32[1]{0}', space=sflag, size = 0x4, scoped, tag = 'scoped memory for tpu_custom_call.1']
    #allocation7 [shape = 'u8[131072]{0}', space=vmem, size = 0x20000, scoped, tag = 'input window, operand 5, single buffered']
    #allocation8 [shape = 'u8[8192]{0}', space=vmem, size = 0x2000, scoped, tag = 'output window, operand 0']
    %11 = vsyncpa [#allocation3], 0
    %s12 = scalar_lea.sflag [#allocation3], 1
    %13 = vsyncpa %s12, 0
    %14 = vsyncpa [#allocation6], 0
    %15 = vsyncpa [#allocation4], 0
    %s16 = scalar_lea.sflag [#allocation4], 1
    %17 = vsyncpa %s16, 0
    loop: start=0, step=1, limit=6
    $region2: #{tpu_custom_call.1} parent=1 // loop_pre_header
      _
    $region3: #{tpu_custom_call.1} parent=1 // loop_header
      %s19 = sphi 0, %s23
      %p20 = scmp.ge.s32.totalorder %s19, 6
      %s29 = sphi 0, %s31
      %s32 = sphi 0, %s29
      %s33 = sphi 0, %s32
      %s49 = sphi 0, %s33
      %s55 = sphi 0, %s57
      %s58 = sphi 0, %s55
      %s59 = sphi 0, %s58
      %s75 = sphi 0, %s59
      %s81 = sphi 0, %s83
      %s84 = sphi 0, %s81
      %s85 = sphi 0, %s84
      %s101 = sphi 0, %s85
      %s105 = sphi 0, %s105
      %s107 = sphi 0, %s105
      %s108 = sphi 0, %s107
      %s122 = sphi 0, %s108
      %s126 = sphi 0, %s126
      %s128 = sphi 0, %s126
      %s129 = sphi 0, %s128
      %s143 = sphi 0, %s129
      %s147 = sphi 0, %s147
      %s149 = sphi 0, %s147
      %s150 = sphi 0, %s149
      %s164 = sphi 0, %s150
      %s170 = sphi 0, %s172
      %s173 = sphi 0, %s170
      %s174 = sphi 0, %s173
      %s190 = sphi 0, %s174
    $region4: #{tpu_custom_call.1} parent=1 // loop_header_branch
      %22 = sbr.rel (%p20) target = $region8
    $region5: #{tpu_custom_call.1} parent=1 // loop_body
      %s24 = ssub.s32 %s19, 1
      %s25 = ssub.s32 %s19, 2
      %s26 = sadd.s32 %s19, 1
      %s27 = ssub.s32 %s19, %s26
      %p28 = scmp.eq.s32.totalorder %s27, 0
      %s30 = sadd.s32 %s29, 1
      %s31 = scalar_select %p28, %s29, %s30
      %p34 = pneg %p28
      %p35 = scmp.eq.s32.totalorder %s19, 3
      %p36 = por %p34, %p35
      %p37 = scmp.ne.s32.totalorder %s29, %s32
      %p38 = scmp.eq.s32.totalorder %s19, 0
      %p39 = por %p37, %p38
      %p40 = scmp.ne.s32.totalorder %s29, %s32
      %p41 = scmp.eq.s32.totalorder %s24, 3
      %p42 = por %p40, %p41
      %p43 = scmp.ne.s32.totalorder %s32, %s33
      %p44 = scmp.eq.s32.totalorder %s24, 0
      %p45 = por %p43, %p44
      %p46 = scmp.ne.s32.totalorder %s32, %s33
      %p47 = scmp.eq.s32.totalorder %s25, 3
      %p48 = por %p46, %p47
      %p50 = scmp.ne.s32.totalorder %s33, %s49
      %p51 = scmp.eq.s32.totalorder %s25, 0
      %p52 = por %p50, %p51
      %s53 = ssub.s32 %s19, %s26
      %p54 = scmp.eq.s32.totalorder %s53, 0
      %s56 = sadd.s32 %s55, 1
      %s57 = scalar_select %p54, %s55, %s56
      %p60 = pneg %p54
      %p61 = scmp.eq.s32.totalorder %s19, 3
      %p62 = por %p60, %p61
      %p63 = scmp.ne.s32.totalorder %s55, %s58
      %p64 = scmp.eq.s32.totalorder %s19, 0
      %p65 = por %p63, %p64
      %p66 = scmp.ne.s32.totalorder %s55, %s58
      %p67 = scmp.eq.s32.totalorder %s24, 3
      %p68 = por %p66, %p67
      %p69 = scmp.ne.s32.totalorder %s58, %s59
      %p70 = scmp.eq.s32.totalorder %s24, 0
      %p71 = por %p69, %p70
      %p72 = scmp.ne.s32.totalorder %s58, %s59
      %p73 = scmp.eq.s32.totalorder %s25, 3
      %p74 = por %p72, %p73
      %p76 = scmp.ne.s32.totalorder %s59, %s75
      %p77 = scmp.eq.s32.totalorder %s25, 0
      %p78 = por %p76, %p77
      %s79 = ssub.s32 %s19, %s26
      %p80 = scmp.eq.s32.totalorder %s79, 0
      %s82 = sadd.s32 %s81, 1
      %s83 = scalar_select %p80, %s81, %s82
      %p86 = pneg %p80
      %p87 = scmp.eq.s32.totalorder %s19, 3
      %p88 = por %p86, %p87
      %p89 = scmp.ne.s32.totalorder %s81, %s84
      %p90 = scmp.eq.s32.totalorder %s19, 0
      %p91 = por %p89, %p90
      %p92 = scmp.ne.s32.totalorder %s81, %s84
      %p93 = scmp.eq.s32.totalorder %s24, 3
      %p94 = por %p92, %p93
      %p95 = scmp.ne.s32.totalorder %s84, %s85
      %p96 = scmp.eq.s32.totalorder %s24, 0
      %p97 = por %p95, %p96
      %p98 = scmp.ne.s32.totalorder %s84, %s85
      %p99 = scmp.eq.s32.totalorder %s25, 3
      %p100 = por %p98, %p99
      %p102 = scmp.ne.s32.totalorder %s85, %s101
      %p103 = scmp.eq.s32.totalorder %s25, 0
      %p104 = por %p102, %p103
      %s106 = sadd.s32 %s105, 1
      %p109 = scmp.eq.s32.totalorder %s19, 3
      %p110 = scmp.ne.s32.totalorder %s105, %s107
      %p111 = scmp.eq.s32.totalorder %s19, 0
      %p112 = por %p110, %p111
      %p113 = scmp.ne.s32.totalorder %s105, %s107
      %p114 = scmp.eq.s32.totalorder %s24, 3
      %p115 = por %p113, %p114
      %p116 = scmp.ne.s32.totalorder %s107, %s108
      %p117 = scmp.eq.s32.totalorder %s24, 0
      %p118 = por %p116, %p117
      %p119 = scmp.ne.s32.totalorder %s107, %s108
      %p120 = scmp.eq.s32.totalorder %s25, 3
      %p121 = por %p119, %p120
      %p123 = scmp.ne.s32.totalorder %s108, %s122
      %p124 = scmp.eq.s32.totalorder %s25, 0
      %p125 = por %p123, %p124
      %s127 = sadd.s32 %s126, 1
      %p130 = scmp.eq.s32.totalorder %s19, 3
      %p131 = scmp.ne.s32.totalorder %s126, %s128
      %p132 = scmp.eq.s32.totalorder %s19, 0
      %p133 = por %p131, %p132
      %p134 = scmp.ne.s32.totalorder %s126, %s128
      %p135 = scmp.eq.s32.totalorder %s24, 3
      %p136 = por %p134, %p135
      %p137 = scmp.ne.s32.totalorder %s128, %s129
      %p138 = scmp.eq.s32.totalorder %s24, 0
      %p139 = por %p137, %p138
      %p140 = scmp.ne.s32.totalorder %s128, %s129
      %p141 = scmp.eq.s32.totalorder %s25, 3
      %p142 = por %p140, %p141
      %p144 = scmp.ne.s32.totalorder %s129, %s143
      %p145 = scmp.eq.s32.totalorder %s25, 0
      %p146 = por %p144, %p145
      %s148 = sadd.s32 %s147, 1
      %p151 = scmp.eq.s32.totalorder %s19, 3
      %p152 = scmp.ne.s32.totalorder %s147, %s149
      %p153 = scmp.eq.s32.totalorder %s19, 0
      %p154 = por %p152, %p153
      %p155 = scmp.ne.s32.totalorder %s147, %s149
      %p156 = scmp.eq.s32.totalorder %s24, 3
      %p157 = por %p155, %p156
      %p158 = scmp.ne.s32.totalorder %s149, %s150
      %p159 = scmp.eq.s32.totalorder %s24, 0
      %p160 = por %p158, %p159
      %p161 = scmp.ne.s32.totalorder %s149, %s150
      %p162 = scmp.eq.s32.totalorder %s25, 3
      %p163 = por %p161, %p162
      %p165 = scmp.ne.s32.totalorder %s150, %s164
      %p166 = scmp.eq.s32.totalorder %s25, 0
      %p167 = por %p165, %p166
      %s168 = ssub.s32 %s19, %s26
      %p169 = scmp.eq.s32.totalorder %s168, 0
      %s171 = sadd.s32 %s170, 1
      %s172 = scalar_select %p169, %s170, %s171
      %p175 = pneg %p169
      %p176 = scmp.eq.s32.totalorder %s19, 3
      %p177 = por %p175, %p176
      %p178 = scmp.ne.s32.totalorder %s170, %s173
      %p179 = scmp.eq.s32.totalorder %s19, 0
      %p180 = por %p178, %p179
      %p181 = scmp.ne.s32.totalorder %s170, %s173
      %p182 = scmp.eq.s32.totalorder %s24, 3
      %p183 = por %p181, %p182
      %p184 = scmp.ne.s32.totalorder %s173, %s174
      %p185 = scmp.eq.s32.totalorder %s24, 0
      %p186 = por %p184, %p185
      %p187 = scmp.ne.s32.totalorder %s173, %s174
      %p188 = scmp.eq.s32.totalorder %s25, 3
      %p189 = por %p187, %p188
      %p191 = scmp.ne.s32.totalorder %s174, %s190
      %p192 = scmp.eq.s32.totalorder %s25, 0
      %p193 = por %p191, %p192
      %p194 = scmp.le.s32.totalorder 1, %s19
      %p195 = scmp.lt.s32.totalorder %s19, 5
      %p196 = pnand %p194, %p195
      %p197 = pneg %p196
      // Predicated region
      $region9: #{tpu_custom_call.1} parent=5 // pred_check
        _
      $region10: #{tpu_custom_call.1} parent=5 // pred_check_branch
        %199 = sbr.rel (%p196) target = $region12
      $region11: #{tpu_custom_call.1} parent=5 // pred_region
        %s200 = ssub.s32 %s19, 1
        // Predicated region
        $region13: #{tpu_custom_call.1} parent=11 // pred_check
          %p201 = pneg %p118
        $region14: #{tpu_custom_call.1} parent=11 // pred_check_branch
          %203 = sbr.rel (%p201) target = $region16
        $region15: #{tpu_custom_call.1} parent=11 // pred_region
          %s205 = ssub.s32 4096, 4096
          %206 = vsyncadd [#allocation6], %s205
          %s207 = sshll.u32 [#allocation5], 4
          %s208 = int_to_ptr.vmem [resolvable:$true] %s207
          %213 = dma.hbm_to_vmem [thread:$0]  %s3, 4096, %s208, [#allocation6], 256, 256, 16
        $region16: #{tpu_custom_call.1} parent=11 // pred_fallthru
          _
        // Predicated region
        $region17: #{tpu_custom_call.1} parent=11 // pred_check
          %p214 = pneg %p139
        $region18: #{tpu_custom_call.1} parent=11 // pred_check_branch
          %216 = sbr.rel (%p214) target = $region20
        $region19: #{tpu_custom_call.1} parent=11 // pred_region
          _
        $region20: #{tpu_custom_call.1} parent=11 // pred_fallthru
          _
        // Predicated region
        $region21: #{tpu_custom_call.1} parent=11 // pred_check
          %p217 = pneg %p160
        $region22: #{tpu_custom_call.1} parent=11 // pred_check_branch
          %219 = sbr.rel (%p217) target = $region24
        $region23: #{tpu_custom_call.1} parent=11 // pred_region
          %s221 = ssub.s32 4096, 4096
          %222 = vsyncadd [#allocation6], %s221
          %s223 = sshll.u32 [#allocation7], 4
          %s224 = int_to_ptr.vmem [resolvable:$true] %s223
          %229 = dma.hbm_to_vmem [thread:$0]  %s5, 4096, %s224, [#allocation6], 128, 128, 8
        $region24: #{tpu_custom_call.1} parent=11 // pred_fallthru
          _
      $region12: #{tpu_custom_call.1} parent=5 // pred_fallthru
        _
      %p230 = scmp.lt.s32.totalorder %s19, 4
      // Predicated region
      $region25: #{tpu_custom_call.1} parent=5 // pred_check
        %p231 = pneg %p230
      $region26: #{tpu_custom_call.1} parent=5 // pred_check_branch
        %233 = sbr.rel (%p231) target = $region28
      $region27: #{tpu_custom_call.1} parent=5 // pred_region
        // Predicated region
        $region29: #{tpu_custom_call.1} parent=27 // pred_check
          %p234 = pneg %p39
        $region30: #{tpu_custom_call.1} parent=27 // pred_check_branch
          %236 = sbr.rel (%p234) target = $region32
        $region31: #{tpu_custom_call.1} parent=27 // pred_region
          %p237 = scmp.lt.s32.totalorder %s19, 3
          %s238 = scalar_select %p237, %s19, 3
          %s239 = smul.addr %s238, 8
          %s240 = scalar_lea.vmem %s0, %s239
        $region32: #{tpu_custom_call.1} parent=27 // pred_fallthru
          _
        // Predicated region
        $region33: #{tpu_custom_call.1} parent=27 // pred_check
          %p241 = pneg %p65
        $region34: #{tpu_custom_call.1} parent=27 // pred_check_branch
          %243 = sbr.rel (%p241) target = $region36
        $region35: #{tpu_custom_call.1} parent=27 // pred_region
          %s244 = sand.u32 %s55, 1
          %s245 = scalar_lea.sflag [#allocation3], %s244
          %s246 = sand.u32 %s55, 1
          %s247 = smul.addr %s246, 8
          %s248 = scalar_lea.vmem [#allocation2], %s247
          %s250 = ssub.s32 128, 128
          %251 = vsyncadd %s245, %s250
          %s252 = smul.addr %s19, 128
          %s253 = scalar_lea.hbm %s1, %s252
          %s255 = sshll.u32 %s248, 4
          %s256 = int_to_ptr.vmem [resolvable:$true] %s255
          %258 = dma.hbm_to_vmem [thread:$0]  %s253, 128, %s256, %s245
        $region36: #{tpu_custom_call.1} parent=27 // pred_fallthru
          _
        // Predicated region
        $region37: #{tpu_custom_call.1} parent=27 // pred_check
          %p259 = pneg %p91
        $region38: #{tpu_custom_call.1} parent=27 // pred_check_branch
          %261 = sbr.rel (%p259) target = $region40
        $region39: #{tpu_custom_call.1} parent=27 // pred_region
          %p262 = scmp.lt.s32.totalorder %s19, 3
          %s263 = scalar_select %p262, %s19, 3
          %s264 = smul.addr %s263, 8
          %s265 = scalar_lea.vmem %s2, %s264
        $region40: #{tpu_custom_call.1} parent=27 // pred_fallthru
          _
      $region28: #{tpu_custom_call.1} parent=5 // pred_fallthru
        _
      %p266 = scmp.le.s32.totalorder 1, %s19
      %p267 = scmp.lt.s32.totalorder %s19, 5
      %p268 = pnand %p266, %p267
      %p269 = pneg %p268
      // Predicated region
      $region41: #{tpu_custom_call.1} parent=5 // pred_check
        _
      $region42: #{tpu_custom_call.1} parent=5 // pred_check_branch
        %271 = sbr.rel (%p268) target = $region44
      $region43: #{tpu_custom_call.1} parent=5 // pred_region
        %s272 = ssub.s32 %s19, 1
        %s273 = sand.u32 %s58, 1
        %s274 = scalar_lea.sflag [#allocation3], %s273
        %s275 = sand.u32 %s58, 1
        %s276 = smul.addr %s275, 8
        %s277 = scalar_lea.vmem [#allocation2], %s276
        // Predicated region
        $region45: #{tpu_custom_call.1} parent=43 // pred_check
          %p278 = pneg %p71
        $region46: #{tpu_custom_call.1} parent=43 // pred_check_branch
          %280 = sbr.rel (%p278) target = $region48
        $region47: #{tpu_custom_call.1} parent=43 // pred_region
          %281 = dma.done %s274, 128
        $region48: #{tpu_custom_call.1} parent=43 // pred_fallthru
          _
        // Predicated region
        $region49: #{tpu_custom_call.1} parent=43 // pred_check
          %p282 = pneg %p118
        $region50: #{tpu_custom_call.1} parent=43 // pred_check_branch
          %284 = sbr.rel (%p282) target = $region52
        $region51: #{tpu_custom_call.1} parent=43 // pred_region
          %285 = dma.done [#allocation6], 4096
        $region52: #{tpu_custom_call.1} parent=43 // pred_fallthru
          _
        // Predicated region
        $region53: #{tpu_custom_call.1} parent=43 // pred_check
          %p286 = pneg %p160
        $region54: #{tpu_custom_call.1} parent=43 // pred_check_branch
          %288 = sbr.rel (%p286) target = $region56
        $region55: #{tpu_custom_call.1} parent=43 // pred_region
          %289 = dma.done [#allocation6], 4096
        $region56: #{tpu_custom_call.1} parent=43 // pred_fallthru
          _
        %p290 = scmp.lt.s32.totalorder %s24, 3
        %s291 = scalar_select %p290, %s24, 3
        %s292 = smul.addr %s291, 8
        %s293 = scalar_lea.vmem %s0, %s292
        %p294 = pneg %p45
        %p295 = pneg %p42
        %s296 = sand.u32 %s58, 1
        %s297 = scalar_lea.sflag [#allocation3], %s296
        %s298 = sand.u32 %s58, 1
        %s299 = smul.addr %s298, 8
        %s300 = scalar_lea.vmem [#allocation2], %s299
        %p301 = pneg %p71
        %p302 = pneg %p68
        %p303 = scmp.lt.s32.totalorder %s24, 3
        %s304 = scalar_select %p303, %s24, 3
        %s305 = smul.addr %s304, 8
        %s306 = scalar_lea.vmem %s2, %s305
        %p307 = pneg %p97
        %p308 = pneg %p94
        %p309 = pneg %p118
        %p310 = pneg %p115
        %p311 = pneg %p139
        %p312 = pneg %p136
        %p313 = pneg %p160
        %p314 = pneg %p157
        %p315 = pneg %p186
        %p316 = pneg %p183
        %s317 = sand.u32 %s173, 1
        %s318 = scalar_lea.sflag [#allocation4], %s317
        %s319 = sand.u32 %s173, 1
        %s320 = smul.addr %s319, 8
        %s321 = scalar_lea.vmem [#allocation8], %s320
        %p322 = scmp.lt.s32.totalorder %s24, 3
        %s323 = scalar_select %p322, %s24, 3
        %s324 = smul.addr %s323, 8
        %s325 = scalar_lea.vmem %s0, %s324
        %p326 = scmp.lt.s32.totalorder %s24, 3
        %s327 = scalar_select %p326, %s24, 3
        %s328 = smul.addr %s327, 8
        %s329 = scalar_lea.vmem %s2, %s328
        %v330 = vld [vmem:[%s325] sm:$0xff]
        %v331 = vld [vmem:[%s277] sm:$0xff]
        %v332 = vld [vmem:[%s329] sm:$0xff]
        %v333 = vsub.f32 %v330, %v331
        %335 = vset.pattern.permute.xlu0 0
        %336 = vperm.xlu0 %335, %v332
        %v337 = vpop.permute.xlu0 %336
        %v339 = vmul.f32 %v337, %v333
        %v340 = vadd.f32 %v331, %v339
        %v341 = vld [vmem:[#allocation5] sm:$0xff]
        %v342 = vld [vmem:[#allocation5 + $0x8] sm:$0xff]
        %v343 = vld [vmem:[#allocation5 + $0x10] sm:$0xff]
        %v344 = vld [vmem:[#allocation5 + $0x18] sm:$0xff]
        %v345 = vld [vmem:[#allocation5 + $0x20] sm:$0xff]
        %v346 = vld [vmem:[#allocation5 + $0x28] sm:$0xff]
        %v347 = vld [vmem:[#allocation5 + $0x30] sm:$0xff]
        %v348 = vld [vmem:[#allocation5 + $0x38] sm:$0xff]
        %v349 = vld [vmem:[#allocation5 + $0x40] sm:$0xff]
        %v350 = vld [vmem:[#allocation5 + $0x48] sm:$0xff]
        %v351 = vld [vmem:[#allocation5 + $0x50] sm:$0xff]
        %v352 = vld [vmem:[#allocation5 + $0x58] sm:$0xff]
        %v353 = vld [vmem:[#allocation5 + $0x60] sm:$0xff]
        %v354 = vld [vmem:[#allocation5 + $0x68] sm:$0xff]
        %v355 = vld [vmem:[#allocation5 + $0x70] sm:$0xff]
        %v356 = vld [vmem:[#allocation5 + $0x78] sm:$0xff]
        %v357 = vld [vmem:[#allocation5 + $0x80] sm:$0xff]
        %v358 = vld [vmem:[#allocation5 + $0x88] sm:$0xff]
        %v359 = vld [vmem:[#allocation5 + $0x90] sm:$0xff]
        %v360 = vld [vmem:[#allocation5 + $0x98] sm:$0xff]
        %v361 = vld [vmem:[#allocation5 + $0xa0] sm:$0xff]
        %v362 = vld [vmem:[#allocation5 + $0xa8] sm:$0xff]
        %v363 = vld [vmem:[#allocation5 + $0xb0] sm:$0xff]
        %v364 = vld [vmem:[#allocation5 + $0xb8] sm:$0xff]
        %v365 = vld [vmem:[#allocation5 + $0xc0] sm:$0xff]
        %v366 = vld [vmem:[#allocation5 + $0xc8] sm:$0xff]
        %v367 = vld [vmem:[#allocation5 + $0xd0] sm:$0xff]
        %v368 = vld [vmem:[#allocation5 + $0xd8] sm:$0xff]
        %v369 = vld [vmem:[#allocation5 + $0xe0] sm:$0xff]
        %v370 = vld [vmem:[#allocation5 + $0xe8] sm:$0xff]
        %v371 = vld [vmem:[#allocation5 + $0xf0] sm:$0xff]
        %v372 = vld [vmem:[#allocation5 + $0xf8] sm:$0xff]
        %v373 = vld [vmem:[%s4] sm:$0x3]
        %v375 = vlaneseq
        %v376 = vshrl.u32 %v375, 7
        %v377 = vsub.s32 0, %v376
        %v378 = vrot.slane %v373, %v377
        %v379 = vlaneseq
        %v380 = vshrl.u32 %v379, 7
        %v381 = vsub.s32 1, %v380
        %v382 = vrot.slane %v373, %v381
        %385 = vmatprep.subr.mxu0 %v342
        %386 = vmatpush1.msra.mxu0 %v341
        %387 = vmatprep.subr.mxu0 %v344
        %388 = vmatpush1.msra.mxu0 %v343
        %389 = vmatprep.subr.mxu0 %v346
        %390 = vmatpush1.msra.mxu0 %v345
        %391 = vmatprep.subr.mxu0 %v348
        %392 = vmatpush1.msra.mxu0 %v347
        %393 = vmatprep.subr.mxu0 %v350
        %394 = vmatpush1.msra.mxu0 %v349
        %395 = vmatprep.subr.mxu0 %v352
        %396 = vmatpush1.msra.mxu0 %v351
        %397 = vmatprep.subr.mxu0 %v354
        %398 = vmatpush1.msra.mxu0 %v353
        %399 = vmatprep.subr.mxu0 %v356
        %400 = vmatpush1.msra.mxu0 %v355
        %401 = vmatprep.subr.mxu0 %v358
        %402 = vmatpush1.msra.mxu0 %v357
        %403 = vmatprep.subr.mxu0 %v360
        %404 = vmatpush1.msra.mxu0 %v359
        %405 = vmatprep.subr.mxu0 %v362
        %406 = vmatpush1.msra.mxu0 %v361
        %407 = vmatprep.subr.mxu0 %v364
        %408 = vmatpush1.msra.mxu0 %v363
        %409 = vmatprep.subr.mxu0 %v366
        %410 = vmatpush1.msra.mxu0 %v365
        %411 = vmatprep.subr.mxu0 %v368
        %412 = vmatpush1.msra.mxu0 %v367
        %413 = vmatprep.subr.mxu0 %v370
        %414 = vmatpush1.msra.mxu0 %v369
        %415 = vmatprep.subr.mxu0 %v372
        %416 = vmatpush1.msra.mxu0 %v371
        %417 = vmatprep.subr.mxu0 0.0
        %418 = vmatpush1.msra.mxu0 0.0
        %419 = vmatprep.subr.mxu0 0.0
        %420 = vmatpush1.msra.mxu0 0.0
        %421 = vmatprep.subr.mxu0 0.0
        %422 = vmatpush1.msra.mxu0 0.0
        %423 = vmatprep.subr.mxu0 0.0
        %424 = vmatpush1.msra.mxu0 0.0
        %425 = vmatprep.subr.mxu0 0.0
        %426 = vmatpush1.msra.mxu0 0.0
        %427 = vmatprep.subr.mxu0 0.0
        %428 = vmatpush1.msra.mxu0 0.0
        %429 = vmatprep.subr.mxu0 0.0
        %430 = vmatpush1.msra.mxu0 0.0
        %431 = vmatprep.subr.mxu0 0.0
        %432 = vmatpush1.msra.mxu0 0.0
        %433 = vmatprep.subr.mxu0 0.0
        %434 = vmatpush1.msra.mxu0 0.0
        %435 = vmatprep.subr.mxu0 0.0
        %436 = vmatpush1.msra.mxu0 0.0
        %437 = vmatprep.subr.mxu0 0.0
        %438 = vmatpush1.msra.mxu0 0.0
        %439 = vmatprep.subr.mxu0 0.0
        %440 = vmatpush1.msra.mxu0 0.0
        %441 = vmatprep.subr.mxu0 0.0
        %442 = vmatpush1.msra.mxu0 0.0
        %443 = vmatprep.subr.mxu0 0.0
        %444 = vmatpush1.msra.mxu0 0.0
        %445 = vmatprep.subr.mxu0 0.0
        %446 = vmatpush1.msra.mxu0 0.0
        %447 = vmatprep.subr.mxu0 0.0
        %448 = vmatpush1.msra.mxu0 0.0
        %449 = vmatprep.mubr.f32.mxu0 0.0
        %450 = vmatmul.mubr.f32.gmra.mrb[0].mxu0 %v340
        %v451 = vpop.f32.mrb[0].mxu0
        %v452 = vadd.f32 %v378, %v451
        %v453 = vpop.f32.mrb[0].mxu0
        %v454 = vadd.f32 %v382, %v453
        %455 = vdwg.mxu0
        %vm456 = vcmp.gt.f32.partialorder %v452, 0.0
        %vm457 = vcmp.gt.f32.partialorder %v454, 0.0
        %v458 = vsel %vm456, 1, 0
        %v459 = vsel %vm457, 1, 0
        %v460 = vcvt.s32.f32 %v458
        %v461 = vcvt.s32.f32 %v459
        %v462 = vld [vmem:[#allocation7] sm:$0xff]
        %v463 = vld [vmem:[#allocation7 + $0x8] sm:$0xff]
        %v464 = vld [vmem:[#allocation7 + $0x10] sm:$0xff]
        %v465 = vld [vmem:[#allocation7 + $0x18] sm:$0xff]
        %v466 = vld [vmem:[#allocation7 + $0x20] sm:$0xff]
        %v467 = vld [vmem:[#allocation7 + $0x28] sm:$0xff]
        %v468 = vld [vmem:[#allocation7 + $0x30] sm:$0xff]
        %v469 = vld [vmem:[#allocation7 + $0x38] sm:$0xff]
        %v470 = vld [vmem:[#allocation7 + $0x40] sm:$0xff]
        %v471 = vld [vmem:[#allocation7 + $0x48] sm:$0xff]
        %v472 = vld [vmem:[#allocation7 + $0x50] sm:$0xff]
        %v473 = vld [vmem:[#allocation7 + $0x58] sm:$0xff]
        %v474 = vld [vmem:[#allocation7 + $0x60] sm:$0xff]
        %v475 = vld [vmem:[#allocation7 + $0x68] sm:$0xff]
        %v476 = vld [vmem:[#allocation7 + $0x70] sm:$0xff]
        %v477 = vld [vmem:[#allocation7 + $0x78] sm:$0xff]
        %v478 = vld [vmem:[#allocation7 + $0x80] sm:$0xff]
        %v479 = vld [vmem:[#allocation7 + $0x88] sm:$0xff]
        %v480 = vld [vmem:[#allocation7 + $0x90] sm:$0xff]
        %v481 = vld [vmem:[#allocation7 + $0x98] sm:$0xff]
        %v482 = vld [vmem:[#allocation7 + $0xa0] sm:$0xff]
        %v483 = vld [vmem:[#allocation7 + $0xa8] sm:$0xff]
        %v484 = vld [vmem:[#allocation7 + $0xb0] sm:$0xff]
        %v485 = vld [vmem:[#allocation7 + $0xb8] sm:$0xff]
        %v486 = vld [vmem:[#allocation7 + $0xc0] sm:$0xff]
        %v487 = vld [vmem:[#allocation7 + $0xc8] sm:$0xff]
        %v488 = vld [vmem:[#allocation7 + $0xd0] sm:$0xff]
        %v489 = vld [vmem:[#allocation7 + $0xd8] sm:$0xff]
        %v490 = vld [vmem:[#allocation7 + $0xe0] sm:$0xff]
        %v491 = vld [vmem:[#allocation7 + $0xe8] sm:$0xff]
        %v492 = vld [vmem:[#allocation7 + $0xf0] sm:$0xff]
        %v493 = vld [vmem:[#allocation7 + $0xf8] sm:$0xff]
        %494 = vmatprep.subr.mxu0 0.0
        %495 = vmatpush1.msra.mxu0 %v462
        %496 = vmatprep.subr.mxu0 0.0
        %497 = vmatpush1.msra.mxu0 %v463
        %498 = vmatprep.subr.mxu0 0.0
        %499 = vmatpush1.msra.mxu0 %v464
        %500 = vmatprep.subr.mxu0 0.0
        %501 = vmatpush1.msra.mxu0 %v465
        %502 = vmatprep.subr.mxu0 0.0
        %503 = vmatpush1.msra.mxu0 %v466
        %504 = vmatprep.subr.mxu0 0.0
        %505 = vmatpush1.msra.mxu0 %v467
        %506 = vmatprep.subr.mxu0 0.0
        %507 = vmatpush1.msra.mxu0 %v468
        %508 = vmatprep.subr.mxu0 0.0
        %509 = vmatpush1.msra.mxu0 %v469
        %510 = vmatprep.subr.mxu0 0.0
        %511 = vmatpush1.msra.mxu0 %v470
        %512 = vmatprep.subr.mxu0 0.0
        %513 = vmatpush1.msra.mxu0 %v471
        %514 = vmatprep.subr.mxu0 0.0
        %515 = vmatpush1.msra.mxu0 %v472
        %516 = vmatprep.subr.mxu0 0.0
        %517 = vmatpush1.msra.mxu0 %v473
        %518 = vmatprep.subr.mxu0 0.0
        %519 = vmatpush1.msra.mxu0 %v474
        %520 = vmatprep.subr.mxu0 0.0
        %521 = vmatpush1.msra.mxu0 %v475
        %522 = vmatprep.subr.mxu0 0.0
        %523 = vmatpush1.msra.mxu0 %v476
        %524 = vmatprep.subr.mxu0 0.0
        %525 = vmatpush1.msra.mxu0 %v477
        %526 = vmatprep.subr.mxu0 0.0
        %527 = vmatpush1.msra.mxu0 %v478
        %528 = vmatprep.subr.mxu0 0.0
        %529 = vmatpush1.msra.mxu0 %v479
        %530 = vmatprep.subr.mxu0 0.0
        %531 = vmatpush1.msra.mxu0 %v480
        %532 = vmatprep.subr.mxu0 0.0
        %533 = vmatpush1.msra.mxu0 %v481
        %534 = vmatprep.subr.mxu0 0.0
        %535 = vmatpush1.msra.mxu0 %v482
        %536 = vmatprep.subr.mxu0 0.0
        %537 = vmatpush1.msra.mxu0 %v483
        %538 = vmatprep.subr.mxu0 0.0
        %539 = vmatpush1.msra.mxu0 %v484
        %540 = vmatprep.subr.mxu0 0.0
        %541 = vmatpush1.msra.mxu0 %v485
        %542 = vmatprep.subr.mxu0 0.0
        %543 = vmatpush1.msra.mxu0 %v486
        %544 = vmatprep.subr.mxu0 0.0
        %545 = vmatpush1.msra.mxu0 %v487
        %546 = vmatprep.subr.mxu0 0.0
        %547 = vmatpush1.msra.mxu0 %v488
        %548 = vmatprep.subr.mxu0 0.0
        %549 = vmatpush1.msra.mxu0 %v489
        %550 = vmatprep.subr.mxu0 0.0
        %551 = vmatpush1.msra.mxu0 %v490
        %552 = vmatprep.subr.mxu0 0.0
        %553 = vmatpush1.msra.mxu0 %v491
        %554 = vmatprep.subr.mxu0 0.0
        %555 = vmatpush1.msra.mxu0 %v492
        %556 = vmatprep.subr.mxu0 0.0
        %557 = vmatpush1.msra.mxu0 %v493
        %558 = vmatprep.mubr.f32.mxu0 %v461
        %559 = vmatmul.mubr.f32.gmra.mrb[0].mxu0 %v460
        %v560 = vpop.f32.mrb[0].mxu0
        %v561 = vadd.f32 0.0, %v560
        %v562 = vpop.f32.mrb[0].mxu0
        %563 = vdwg.mxu0
        %v564 = vmul.f32 %v561, %v561
        %565 = vadd.xlane.f32.xlu0 %v564
        %v566 = vpop.xlane.xlu0 %565
        %v567 = vrsqrt.pop %v566
        %v568 = vmul.f32 %v566, %v567
        %vm569 = vcmp.eq.f32.partialorder %v566, inf
        %v570 = vsel %vm569, %v566, %v568
        %vm571 = vcmp.eq.f32.partialorder %v566, 0.0
        %v572 = vand.u32 %v566, 2147483648
        %v573 = vsel %vm571, %v572, %v570
        %v574 = vsub.f32 %v573, 1.0
        %v575 = vmul.f32 %v574, %v574
        %vm576 = vcmask 7168
        %v577 = vsel %vm576, %v575, 0.0
        %578 = vadd.xlane.f32.xlu0 %v577
        %v579 = vpop.xlane.xlu0 %578
        %v580 = vrot.slane %v579, 4
        %v581 = vadd.f32 %v579, %v580
        %v582 = vrot.slane %v581, 2
        %v583 = vadd.f32 %v581, %v582
        %v584 = vrot.slane %v583, 1
        %v585 = vadd.f32 %v583, %v584
        %s586 = vtos %v585
        %v587 = vstv %s586
        %588 = vst [vmem:[%s321] sm:$0xff] %v587
        %s589 = sand.u32 %s173, 1
        %s590 = scalar_lea.sflag [#allocation4], %s589
        %s591 = sand.u32 %s173, 1
        %s592 = smul.addr %s591, 8
        %s593 = scalar_lea.vmem [#allocation8], %s592
        // Predicated region
        $region57: #{tpu_custom_call.1} parent=43 // pred_check
          %p594 = pneg %p183
        $region58: #{tpu_custom_call.1} parent=43 // pred_check_branch
          %596 = sbr.rel (%p594) target = $region60
        $region59: #{tpu_custom_call.1} parent=43 // pred_region
          %s598 = ssub.s32 128, 128
          %599 = vsyncadd %s590, %s598
          %s600 = smul.addr %s24, 128
          %s601 = scalar_lea.hbm %s6, %s600
          %s603 = sshll.u32 %s593, 4
          %s604 = int_to_ptr.vmem [resolvable:$true] %s603
          %606 = dma.vmem_to_hbm [thread:$0]  %s604, 128, %s601, %s590
        $region60: #{tpu_custom_call.1} parent=43 // pred_fallthru
          _
      $region44: #{tpu_custom_call.1} parent=5 // pred_fallthru
        _
      %p607 = scmp.le.s32.totalorder 2, %s19
      // Predicated region
      $region61: #{tpu_custom_call.1} parent=5 // pred_check
        %p608 = pneg %p607
      $region62: #{tpu_custom_call.1} parent=5 // pred_check_branch
        %610 = sbr.rel (%p608) target = $region64
      $region63: #{tpu_custom_call.1} parent=5 // pred_region
        %s611 = ssub.s32 %s19, 2
        // Predicated region
        $region65: #{tpu_custom_call.1} parent=63 // pred_check
          %p612 = pneg %p189
        $region66: #{tpu_custom_call.1} parent=63 // pred_check_branch
          %614 = sbr.rel (%p612) target = $region68
        $region67: #{tpu_custom_call.1} parent=63 // pred_region
          %s615 = sand.u32 %s174, 1
          %s616 = scalar_lea.sflag [#allocation4], %s615
          %s617 = sand.u32 %s174, 1
          %s618 = smul.addr %s617, 8
          %s619 = scalar_lea.vmem [#allocation8], %s618
          %620 = dma.done %s616, 128
        $region68: #{tpu_custom_call.1} parent=63 // pred_fallthru
          _
      $region64: #{tpu_custom_call.1} parent=5 // pred_fallthru
        _
    $region6: #{tpu_custom_call.1} parent=1 // loop_footer
      %s23 = sadd.s32 1, %s19
    $region7: #{tpu_custom_call.1} parent=1 // loop_footer_branch
      %18 = sbr.rel target = $region3
    $region8: #{tpu_custom_call.1} parent=1 // loop_exit
      _
    %621 = vsyncpa [#allocation3], 1
    %s622 = scalar_lea.sflag [#allocation3], 1
    %623 = vsyncpa %s622, 1
    %624 = vsyncpa [#allocation6], 1
    %625 = vsyncpa [#allocation4], 1
    %s626 = scalar_lea.sflag [#allocation4], 1
    %627 = vsyncpa %s626, 1

</llo_original>
